<compile_context>
chip_gen: v7x
topology: tpu7x:2x2x1
jax: 0.10.0
libtpu: 0.0.40
codegen_flags: <defaults>
</compile_context>

<pallas_src>
import functools

import jax
import jax.numpy as jnp
from jax.experimental import pallas as pl
from jax.experimental.pallas import tpu as pltpu


def _dense_embedding_kernel(x_ref, b_ref, o_ref, *, precision):
    # x_ref: [tile_n, F]     (VMEM, pipelined over N)
    # b_ref: [F, F*E]        (VMEM, resident across the whole grid)
    # o_ref: [tile_n, F*E]   (VMEM, lane-dense output tile)
    #
    # out[n, f*E + e] = x[n, f] * w[f, e]  via  x @ block_diag(w): each output
    # element sums exactly one nonzero product, so with precision=HIGHEST the
    # MXU path matches the f32 elementwise broadcast-multiply.
    acc = jnp.dot(
        x_ref[...],
        b_ref[...],
        preferred_element_type=jnp.float32,
        precision=precision,
    )
    o_ref[...] = acc.astype(o_ref.dtype)


def dense_embedding(
    x,
    w,
    *,
    tile_n=8192,
    out_dtype=None,
    precision=jax.lax.Precision.HIGHEST,
):
    """x: [N, F], w: [F, E] -> [N, F, E]  (== w[None, :, :] * x[:, :, None])."""
    N, F = x.shape
    F2, E = w.shape
    assert F == F2
    out_dtype = x.dtype if out_dtype is None else jnp.dtype(out_dtype)

    # Block-diagonal weight: B[f, f*E + e] = w[f, e].  Tiny for small F
    # (F*F*E floats); built once in the wrapper, constant index_map keeps it
    # VMEM-resident across the whole grid.
    B = (jnp.eye(F, dtype=w.dtype)[:, :, None] * w[None, :, :]).reshape(F, F * E)

    # Tile over N; clamp for small shapes (sublane dim must be a multiple of 8
    # or the full extent).
    tile_n = max(8, min(tile_n, N)) if N >= 8 else N
    grid = (pl.cdiv(N, tile_n),)

    # Advisory cost for the surrounding XLA schedule: the kernel is dominated by
    # the HBM write of the output, not FLOPs.
    cost = pl.CostEstimate(
        flops=2 * N * F * F * E,
        transcendentals=0,
        bytes_accessed=(
            N * F * x.dtype.itemsize          # x read
            + F * F * E * w.dtype.itemsize    # B read (once)
            + N * F * E * out_dtype.itemsize  # output write (dominant)
        ),
    )

    kernel = functools.partial(_dense_embedding_kernel, precision=precision)

    out_flat = pl.pallas_call(
        kernel,
        out_shape=jax.ShapeDtypeStruct((N, F * E), out_dtype),
        grid_spec=pltpu.PrefetchScalarGridSpec(
            num_scalar_prefetch=0,
            grid=grid,
            in_specs=[
                # x tile: pipelined over N.  NOTE: pads to 128 lanes in VMEM, so
                # each buffer costs tile_n*128*4 B (same as an f32 output tile).
                pl.BlockSpec((tile_n, F), lambda i: (i, 0)),
                # Resident block-diagonal weight (constant block index).
                pl.BlockSpec((F, F * E), lambda i: (0, 0)),
            ],
            out_specs=pl.BlockSpec((tile_n, F * E), lambda i: (i, 0)),
        ),
        compiler_params=pltpu.CompilerParams(
            # v7x: shard N over both TensorCores; if "parallel" doesn't split it
            # there, switch to pltpu.CORE_PARALLEL.  No-op on v5e/v6e (1 TC).
            dimension_semantics=("parallel",),
            # Budget: 2*x + 2*out buffers ~= 32 MiB at tile_n=16384 f32; 48 MiB
            # leaves headroom under v7x's 64 MiB physical VMEM per TC.
            vmem_limit_bytes=48 * 1024 * 1024,
        ),
        cost_estimate=cost,
    )(x, B)

    # Free metadata reshape of the contiguous [N, F*E] result.
    return out_flat.reshape(N, F, E)


if __name__ == "__main__":
    # Small shapes consistent with the module's forward:
    #   N (batch) = 8, dense_num_field = 4, embed_dim = 32  -> F*E = 128 lanes
    N, dense_num_field, embed_dim = 8, 4, 32

    key = jax.random.PRNGKey(0)
    kx, kw = jax.random.split(key)

    # Deterministic "parameter" init mirroring nn.init.normal_ on dense_w of
    # shape (1, dense_num_field, embed_dim); stored here as (F, E).
    dense_w = jax.random.normal(kw, (dense_num_field, embed_dim), dtype=jnp.float32)
    # Input dense feature vector x: [N, dense_num_field]
    x = jax.random.normal(kx, (N, dense_num_field), dtype=jnp.float32)

    # Reference (plain JAX, same semantics as the torch forward).
    ref = dense_w[None, :, :] * x[:, :, None]

    # f32 output path: matches the module exactly (HIGHEST dot precision).
    out = jax.block_until_ready(dense_embedding(x, dense_w))
    assert out.shape == (N, dense_num_field, embed_dim)
    assert jnp.allclose(out, ref, atol=1e-6, rtol=1e-6)

    # bf16 output path (perf review item #1): halves HBM write bytes for
    # consumers that accept bf16 embeddings; f32 MXU accumulate retained.
    out_bf16 = jax.block_until_ready(
        dense_embedding(x, dense_w, out_dtype=jnp.bfloat16)
    )
    assert out_bf16.dtype == jnp.bfloat16
    assert jnp.allclose(out_bf16.astype(jnp.float32), ref, atol=2e-2, rtol=2e-2)

    print("KERNEL_OK")
</pallas_src>

<mosaic_0001>
module attributes {stable_mosaic.version = 11 : i64} {
  func.func @_dense_embedding_kernel(%arg0: i32, %arg1: memref<8x4xf32, #tpu.memory_space<vmem>>, %arg2: memref<4x128xf32, #tpu.memory_space<vmem>>, %arg3: memref<8x128xf32, #tpu.memory_space<vmem>>) attributes {dimension_semantics = [#tpu.dimension_semantics<parallel>], iteration_bounds = array<i64: 1>, scalar_prefetch = 0 : i64, scratch_operands = 0 : i64, tpu.core_type = #tpu.core_type<tc>, window_params = [{transform_indices = @transform_0, window_bounds = array<i64: 8, 4>}, {pipeline_mode = #tpu.pipeline_mode<synchronous>, transform_indices = @transform_1, window_bounds = array<i64: 4, 128>}, {transform_indices = @transform_2, window_bounds = array<i64: 8, 128>}]} {
    %c0 = arith.constant 0 : index
    %c0_0 = arith.constant 0 : index
    %0 = vector.load %arg1[%c0, %c0_0] : memref<8x4xf32, #tpu.memory_space<vmem>>, vector<8x4xf32>
    %c0_1 = arith.constant 0 : index
    %c0_2 = arith.constant 0 : index
    %1 = vector.load %arg2[%c0_1, %c0_2] : memref<4x128xf32, #tpu.memory_space<vmem>>, vector<4x128xf32>
    %cst = arith.constant dense<0.000000e+00> : vector<8x128xf32>
    %2 = tpu.matmul %0, %1, %cst {dimension_numbers = #tpu.dot_dimension_numbers<[1], [0], [0], [1], [0, 0, 1, 1], [], []>, precision = #tpu.contract_precision<fp32>} : vector<8x4xf32>, vector<4x128xf32>, vector<8x128xf32> -> vector<8x128xf32>
    %c0_3 = arith.constant 0 : index
    %c0_4 = arith.constant 0 : index
    %3 = vector.load %arg3[%c0_3, %c0_4] : memref<8x128xf32, #tpu.memory_space<vmem>>, vector<8x128xf32>
    tpu.vector_store %arg3[%c0_3, %c0_4], %2 {strides = array<i32>} : memref<8x128xf32, #tpu.memory_space<vmem>>, vector<8x128xf32>,
    return
  }
  func.func @transform_0(%arg0: i32) -> (i32, i32) {
    %c0_i32 = arith.constant 0 : i32
    %c0_i32_0 = arith.constant 0 : i32
    return %arg0, %c0_i32 : i32, i32
  }
  func.func @transform_1(%arg0: i32) -> (i32, i32) {
    %c0_i32 = arith.constant 0 : i32
    %c0_i32_0 = arith.constant 0 : i32
    %c0_i32_1 = arith.constant 0 : i32
    return %c0_i32, %c0_i32_0 : i32, i32
  }
  func.func @transform_2(%arg0: i32) -> (i32, i32) {
    %c0_i32 = arith.constant 0 : i32
    %c0_i32_0 = arith.constant 0 : i32
    return %arg0, %c0_i32 : i32, i32
  }
}

</mosaic_0001>

<llo_original>
// kernel: tpu_custom_call.1
$region0: #{tpu_custom_call.1}
  #allocation0 [shape = 'u32[]', space=smem, size = 0x4, offset = 0x4, fixed_abs, tag = 'smem constant byte address 0x4 - core index']
  #allocation1 [shape = 'u32[144,128]{1,0:T(1,128)}', space=vmem, size = 0x12000, scoped, tag = 'internal scratch']
  %s0 = inlined_call_operand.vmem [shape: f32[8,4], index: 0, kind: input, shape index: {}]
  %s1 = inlined_call_operand.vmem [shape: f32[4,128], index: 1, kind: input, shape index: {}]
  %s2 = inlined_call_operand.hbm [shape: f32[8,128], index: 2, kind: output, shape index: {}]
  %s3 = sld [smem:[#allocation0]]
  $region18: #{tpu_custom_call.1} parent=0
    _
  %s5 = ssub.s32 1, %s3
  %s6 = scalar_select 0, %s5, %s3
  $region1: #{tpu_custom_call.1} parent=0
    #allocation2 [shape = 'u8[4096]{0}', space=vmem, size = 0x1000, scoped, tag = 'output window, operand 0, single buffered']
    #allocation3 [shape = 's32[1]{0}', space=sflag, size = 0x4, scoped, tag = 'scoped memory for tpu_custom_call.1']
    %7 = vsyncpa [#allocation3], 0
    // Predicated region
    $region2: #{tpu_custom_call.1} parent=1 // pred_check
      _
    $region3: #{tpu_custom_call.1} parent=1 // pred_check_branch
      %9 = sbr.rel (0) target = $region5
    $region4: #{tpu_custom_call.1} parent=1 // pred_region
      _
    $region5: #{tpu_custom_call.1} parent=1 // pred_fallthru
      _
    // Predicated region
    $region6: #{tpu_custom_call.1} parent=1 // pred_check
      _
    $region7: #{tpu_custom_call.1} parent=1 // pred_check_branch
      %11 = sbr.rel (0) target = $region9
    $region8: #{tpu_custom_call.1} parent=1 // pred_region
      _
    $region9: #{tpu_custom_call.1} parent=1 // pred_fallthru
      _
    %v12 = vld [vmem:[%s0] sm:$0xff]
    %v13 = vld [vmem:[%s1] sm:$0xf]
    %vm14 = vcmask 31744
    %v16 = vsel %vm14, %v12, 0
    %vm18 = vcmask 1043456
    %v20 = vsel %vm18, %v13, 0
    %22 = vmatprep.subr.mxu0 0.0
    %v23 = vand.u32 %v20, 4294901760
    %24 = vmatpush1.msra.mxu0 %v23
    %25 = vmatprep.subr.mxu0 0.0
    %26 = vmatpush1.msra.mxu0 0.0
    %27 = vmatprep.subr.mxu0 0.0
    %28 = vmatpush1.msra.mxu0 0.0
    %29 = vmatprep.subr.mxu0 0.0
    %30 = vmatpush1.msra.mxu0 0.0
    %31 = vmatprep.subr.mxu0 0.0
    %32 = vmatpush1.msra.mxu0 0.0
    %33 = vmatprep.subr.mxu0 0.0
    %34 = vmatpush1.msra.mxu0 0.0
    %35 = vmatprep.subr.mxu0 0.0
    %36 = vmatpush1.msra.mxu0 0.0
    %37 = vmatprep.subr.mxu0 0.0
    %38 = vmatpush1.msra.mxu0 0.0
    %39 = vmatprep.subr.mxu0 0.0
    %40 = vmatpush1.msra.mxu0 0.0
    %41 = vmatprep.subr.mxu0 0.0
    %42 = vmatpush1.msra.mxu0 0.0
    %43 = vmatprep.subr.mxu0 0.0
    %44 = vmatpush1.msra.mxu0 0.0
    %45 = vmatprep.subr.mxu0 0.0
    %46 = vmatpush1.msra.mxu0 0.0
    %47 = vmatprep.subr.mxu0 0.0
    %48 = vmatpush1.msra.mxu0 0.0
    %49 = vmatprep.subr.mxu0 0.0
    %50 = vmatpush1.msra.mxu0 0.0
    %51 = vmatprep.subr.mxu0 0.0
    %52 = vmatpush1.msra.mxu0 0.0
    %53 = vmatprep.subr.mxu0 0.0
    %54 = vmatpush1.msra.mxu0 0.0
    %55 = vmatprep.subr.mxu0 0.0
    %56 = vmatpush1.msra.mxu0 0.0
    %57 = vmatprep.subr.mxu0 0.0
    %58 = vmatpush1.msra.mxu0 0.0
    %59 = vmatprep.subr.mxu0 0.0
    %60 = vmatpush1.msra.mxu0 0.0
    %61 = vmatprep.subr.mxu0 0.0
    %62 = vmatpush1.msra.mxu0 0.0
    %63 = vmatprep.subr.mxu0 0.0
    %64 = vmatpush1.msra.mxu0 0.0
    %65 = vmatprep.subr.mxu0 0.0
    %66 = vmatpush1.msra.mxu0 0.0
    %67 = vmatprep.subr.mxu0 0.0
    %68 = vmatpush1.msra.mxu0 0.0
    %69 = vmatprep.subr.mxu0 0.0
    %70 = vmatpush1.msra.mxu0 0.0
    %71 = vmatprep.subr.mxu0 0.0
    %72 = vmatpush1.msra.mxu0 0.0
    %73 = vmatprep.subr.mxu0 0.0
    %74 = vmatpush1.msra.mxu0 0.0
    %75 = vmatprep.subr.mxu0 0.0
    %76 = vmatpush1.msra.mxu0 0.0
    %77 = vmatprep.subr.mxu0 0.0
    %78 = vmatpush1.msra.mxu0 0.0
    %79 = vmatprep.subr.mxu0 0.0
    %80 = vmatpush1.msra.mxu0 0.0
    %81 = vmatprep.subr.mxu0 0.0
    %82 = vmatpush1.msra.mxu0 0.0
    %83 = vmatprep.subr.mxu0 0.0
    %84 = vmatpush1.msra.mxu0 0.0
    %85 = vmatprep.subr.mxu0 0.0
    %86 = vmatpush1.msra.mxu0 0.0
    %87 = vmatprep.mubr.f32.mxu0 0.0
    %v88 = vand.u32 %v16, 4294901760
    %v89 = vsub.f32 %v16, %v88
    %v90 = vand.u32 %v89, 4294901760
    %v91 = vsub.f32 %v89, %v90
    %v92 = vand.u32 %v91, 4294901760
    %93 = vmatmul.mubr.f32.gmra.mrb[0].mxu0 %v92
    %v94 = vpop.f32.mrb[0].mxu0
    %v95 = vadd.f32 0.0, %v94
    %v96 = vpop.f32.mrb[0].mxu0
    %97 = vdwg.mxu0
    %98 = vmatprep.subr.mxu0 0.0
    %v99 = vand.u32 %v20, 4294901760
    %v100 = vsub.f32 %v20, %v99
    %v101 = vand.u32 %v100, 4294901760
    %v102 = vsub.f32 %v100, %v101
    %v103 = vand.u32 %v102, 4294901760
    %104 = vmatpush1.msra.mxu0 %v103
    %105 = vmatprep.subr.mxu0 0.0
    %106 = vmatpush1.msra.mxu0 0.0
    %107 = vmatprep.subr.mxu0 0.0
    %108 = vmatpush1.msra.mxu0 0.0
    %109 = vmatprep.subr.mxu0 0.0
    %110 = vmatpush1.msra.mxu0 0.0
    %111 = vmatprep.subr.mxu0 0.0
    %112 = vmatpush1.msra.mxu0 0.0
    %113 = vmatprep.subr.mxu0 0.0
    %114 = vmatpush1.msra.mxu0 0.0
    %115 = vmatprep.subr.mxu0 0.0
    %116 = vmatpush1.msra.mxu0 0.0
    %117 = vmatprep.subr.mxu0 0.0
    %118 = vmatpush1.msra.mxu0 0.0
    %119 = vmatprep.subr.mxu0 0.0
    %120 = vmatpush1.msra.mxu0 0.0
    %121 = vmatprep.subr.mxu0 0.0
    %122 = vmatpush1.msra.mxu0 0.0
    %123 = vmatprep.subr.mxu0 0.0
    %124 = vmatpush1.msra.mxu0 0.0
    %125 = vmatprep.subr.mxu0 0.0
    %126 = vmatpush1.msra.mxu0 0.0
    %127 = vmatprep.subr.mxu0 0.0
    %128 = vmatpush1.msra.mxu0 0.0
    %129 = vmatprep.subr.mxu0 0.0
    %130 = vmatpush1.msra.mxu0 0.0
    %131 = vmatprep.subr.mxu0 0.0
    %132 = vmatpush1.msra.mxu0 0.0
    %133 = vmatprep.subr.mxu0 0.0
    %134 = vmatpush1.msra.mxu0 0.0
    %135 = vmatprep.subr.mxu0 0.0
    %136 = vmatpush1.msra.mxu0 0.0
    %137 = vmatprep.subr.mxu0 0.0
    %138 = vmatpush1.msra.mxu0 0.0
    %139 = vmatprep.subr.mxu0 0.0
    %140 = vmatpush1.msra.mxu0 0.0
    %141 = vmatprep.subr.mxu0 0.0
    %142 = vmatpush1.msra.mxu0 0.0
    %143 = vmatprep.subr.mxu0 0.0
    %144 = vmatpush1.msra.mxu0 0.0
    %145 = vmatprep.subr.mxu0 0.0
    %146 = vmatpush1.msra.mxu0 0.0
    %147 = vmatprep.subr.mxu0 0.0
    %148 = vmatpush1.msra.mxu0 0.0
    %149 = vmatprep.subr.mxu0 0.0
    %150 = vmatpush1.msra.mxu0 0.0
    %151 = vmatprep.subr.mxu0 0.0
    %152 = vmatpush1.msra.mxu0 0.0
    %153 = vmatprep.subr.mxu0 0.0
    %154 = vmatpush1.msra.mxu0 0.0
    %155 = vmatprep.subr.mxu0 0.0
    %156 = vmatpush1.msra.mxu0 0.0
    %157 = vmatprep.subr.mxu0 0.0
    %158 = vmatpush1.msra.mxu0 0.0
    %159 = vmatprep.subr.mxu0 0.0
    %160 = vmatpush1.msra.mxu0 0.0
    %161 = vmatprep.subr.mxu0 0.0
    %162 = vmatpush1.msra.mxu0 0.0
    %163 = vmatprep.subr.mxu0 0.0
    %164 = vmatpush1.msra.mxu0 0.0
    %165 = vmatprep.subr.mxu0 0.0
    %166 = vmatpush1.msra.mxu0 0.0
    %167 = vmatprep.mubr.f32.mxu0 0.0
    %v168 = vand.u32 %v16, 4294901760
    %169 = vmatmul.mubr.f32.gmra.mrb[0].mxu0 %v168
    %v170 = vpop.f32.mrb[0].mxu0
    %v171 = vadd.f32 %v95, %v170
    %v172 = vpop.f32.mrb[0].mxu0
    %173 = vdwg.mxu0
    %174 = vmatprep.subr.mxu0 0.0
    %v175 = vand.u32 %v20, 4294901760
    %v176 = vsub.f32 %v20, %v175
    %177 = vmatpush1.msra.mxu0 %v176
    %178 = vmatprep.subr.mxu0 0.0
    %179 = vmatpush1.msra.mxu0 0.0
    %180 = vmatprep.subr.mxu0 0.0
    %181 = vmatpush1.msra.mxu0 0.0
    %182 = vmatprep.subr.mxu0 0.0
    %183 = vmatpush1.msra.mxu0 0.0
    %184 = vmatprep.subr.mxu0 0.0
    %185 = vmatpush1.msra.mxu0 0.0
    %186 = vmatprep.subr.mxu0 0.0
    %187 = vmatpush1.msra.mxu0 0.0
    %188 = vmatprep.subr.mxu0 0.0
    %189 = vmatpush1.msra.mxu0 0.0
    %190 = vmatprep.subr.mxu0 0.0
    %191 = vmatpush1.msra.mxu0 0.0
    %192 = vmatprep.subr.mxu0 0.0
    %193 = vmatpush1.msra.mxu0 0.0
    %194 = vmatprep.subr.mxu0 0.0
    %195 = vmatpush1.msra.mxu0 0.0
    %196 = vmatprep.subr.mxu0 0.0
    %197 = vmatpush1.msra.mxu0 0.0
    %198 = vmatprep.subr.mxu0 0.0
    %199 = vmatpush1.msra.mxu0 0.0
    %200 = vmatprep.subr.mxu0 0.0
    %201 = vmatpush1.msra.mxu0 0.0
    %202 = vmatprep.subr.mxu0 0.0
    %203 = vmatpush1.msra.mxu0 0.0
    %204 = vmatprep.subr.mxu0 0.0
    %205 = vmatpush1.msra.mxu0 0.0
    %206 = vmatprep.subr.mxu0 0.0
    %207 = vmatpush1.msra.mxu0 0.0
    %208 = vmatprep.subr.mxu0 0.0
    %209 = vmatpush1.msra.mxu0 0.0
    %210 = vmatprep.subr.mxu0 0.0
    %211 = vmatpush1.msra.mxu0 0.0
    %212 = vmatprep.subr.mxu0 0.0
    %213 = vmatpush1.msra.mxu0 0.0
    %214 = vmatprep.subr.mxu0 0.0
    %215 = vmatpush1.msra.mxu0 0.0
    %216 = vmatprep.subr.mxu0 0.0
    %217 = vmatpush1.msra.mxu0 0.0
    %218 = vmatprep.subr.mxu0 0.0
    %219 = vmatpush1.msra.mxu0 0.0
    %220 = vmatprep.subr.mxu0 0.0
    %221 = vmatpush1.msra.mxu0 0.0
    %222 = vmatprep.subr.mxu0 0.0
    %223 = vmatpush1.msra.mxu0 0.0
    %224 = vmatprep.subr.mxu0 0.0
    %225 = vmatpush1.msra.mxu0 0.0
    %226 = vmatprep.subr.mxu0 0.0
    %227 = vmatpush1.msra.mxu0 0.0
    %228 = vmatprep.subr.mxu0 0.0
    %229 = vmatpush1.msra.mxu0 0.0
    %230 = vmatprep.subr.mxu0 0.0
    %231 = vmatpush1.msra.mxu0 0.0
    %232 = vmatprep.subr.mxu0 0.0
    %233 = vmatpush1.msra.mxu0 0.0
    %234 = vmatprep.subr.mxu0 0.0
    %235 = vmatpush1.msra.mxu0 0.0
    %236 = vmatprep.subr.mxu0 0.0
    %237 = vmatpush1.msra.mxu0 0.0
    %238 = vmatprep.subr.mxu0 0.0
    %239 = vmatpush1.msra.mxu0 0.0
    %240 = vmatprep.mubr.f32.mxu0 0.0
    %v241 = vand.u32 %v16, 4294901760
    %v242 = vsub.f32 %v16, %v241
    %243 = vmatmul.mubr.f32.gmra.mrb[0].mxu0 %v242
    %v244 = vpop.f32.mrb[0].mxu0
    %v245 = vadd.f32 %v171, %v244
    %v246 = vpop.f32.mrb[0].mxu0
    %247 = vdwg.mxu0
    %248 = vmatprep.subr.mxu0 0.0
    %v249 = vand.u32 %v20, 4294901760
    %250 = vmatpush1.msra.mxu0 %v249
    %251 = vmatprep.subr.mxu0 0.0
    %252 = vmatpush1.msra.mxu0 0.0
    %253 = vmatprep.subr.mxu0 0.0
    %254 = vmatpush1.msra.mxu0 0.0
    %255 = vmatprep.subr.mxu0 0.0
    %256 = vmatpush1.msra.mxu0 0.0
    %257 = vmatprep.subr.mxu0 0.0
    %258 = vmatpush1.msra.mxu0 0.0
    %259 = vmatprep.subr.mxu0 0.0
    %260 = vmatpush1.msra.mxu0 0.0
    %261 = vmatprep.subr.mxu0 0.0
    %262 = vmatpush1.msra.mxu0 0.0
    %263 = vmatprep.subr.mxu0 0.0
    %264 = vmatpush1.msra.mxu0 0.0
    %265 = vmatprep.subr.mxu0 0.0
    %266 = vmatpush1.msra.mxu0 0.0
    %267 = vmatprep.subr.mxu0 0.0
    %268 = vmatpush1.msra.mxu0 0.0
    %269 = vmatprep.subr.mxu0 0.0
    %270 = vmatpush1.msra.mxu0 0.0
    %271 = vmatprep.subr.mxu0 0.0
    %272 = vmatpush1.msra.mxu0 0.0
    %273 = vmatprep.subr.mxu0 0.0
    %274 = vmatpush1.msra.mxu0 0.0
    %275 = vmatprep.subr.mxu0 0.0
    %276 = vmatpush1.msra.mxu0 0.0
    %277 = vmatprep.subr.mxu0 0.0
    %278 = vmatpush1.msra.mxu0 0.0
    %279 = vmatprep.subr.mxu0 0.0
    %280 = vmatpush1.msra.mxu0 0.0
    %281 = vmatprep.subr.mxu0 0.0
    %282 = vmatpush1.msra.mxu0 0.0
    %283 = vmatprep.subr.mxu0 0.0
    %284 = vmatpush1.msra.mxu0 0.0
    %285 = vmatprep.subr.mxu0 0.0
    %286 = vmatpush1.msra.mxu0 0.0
    %287 = vmatprep.subr.mxu0 0.0
    %288 = vmatpush1.msra.mxu0 0.0
    %289 = vmatprep.subr.mxu0 0.0
    %290 = vmatpush1.msra.mxu0 0.0
    %291 = vmatprep.subr.mxu0 0.0
    %292 = vmatpush1.msra.mxu0 0.0
    %293 = vmatprep.subr.mxu0 0.0
    %294 = vmatpush1.msra.mxu0 0.0
    %295 = vmatprep.subr.mxu0 0.0
    %296 = vmatpush1.msra.mxu0 0.0
    %297 = vmatprep.subr.mxu0 0.0
    %298 = vmatpush1.msra.mxu0 0.0
    %299 = vmatprep.subr.mxu0 0.0
    %300 = vmatpush1.msra.mxu0 0.0
    %301 = vmatprep.subr.mxu0 0.0
    %302 = vmatpush1.msra.mxu0 0.0
    %303 = vmatprep.subr.mxu0 0.0
    %304 = vmatpush1.msra.mxu0 0.0
    %305 = vmatprep.subr.mxu0 0.0
    %306 = vmatpush1.msra.mxu0 0.0
    %307 = vmatprep.subr.mxu0 0.0
    %308 = vmatpush1.msra.mxu0 0.0
    %309 = vmatprep.subr.mxu0 0.0
    %310 = vmatpush1.msra.mxu0 0.0
    %311 = vmatprep.subr.mxu0 0.0
    %312 = vmatpush1.msra.mxu0 0.0
    %313 = vmatprep.mubr.f32.mxu0 0.0
    %v314 = vand.u32 %v16, 4294901760
    %v315 = vsub.f32 %v16, %v314
    %v316 = vand.u32 %v315, 4294901760
    %317 = vmatmul.mubr.f32.gmra.mrb[0].mxu0 %v316
    %v318 = vpop.f32.mrb[0].mxu0
    %v319 = vadd.f32 %v245, %v318
    %v320 = vpop.f32.mrb[0].mxu0
    %321 = vdwg.mxu0
    %322 = vmatprep.subr.mxu0 0.0
    %v323 = vand.u32 %v20, 4294901760
    %v324 = vsub.f32 %v20, %v323
    %v325 = vand.u32 %v324, 4294901760
    %326 = vmatpush1.msra.mxu0 %v325
    %327 = vmatprep.subr.mxu0 0.0
    %328 = vmatpush1.msra.mxu0 0.0
    %329 = vmatprep.subr.mxu0 0.0
    %330 = vmatpush1.msra.mxu0 0.0
    %331 = vmatprep.subr.mxu0 0.0
    %332 = vmatpush1.msra.mxu0 0.0
    %333 = vmatprep.subr.mxu0 0.0
    %334 = vmatpush1.msra.mxu0 0.0
    %335 = vmatprep.subr.mxu0 0.0
    %336 = vmatpush1.msra.mxu0 0.0
    %337 = vmatprep.subr.mxu0 0.0
    %338 = vmatpush1.msra.mxu0 0.0
    %339 = vmatprep.subr.mxu0 0.0
    %340 = vmatpush1.msra.mxu0 0.0
    %341 = vmatprep.subr.mxu0 0.0
    %342 = vmatpush1.msra.mxu0 0.0
    %343 = vmatprep.subr.mxu0 0.0
    %344 = vmatpush1.msra.mxu0 0.0
    %345 = vmatprep.subr.mxu0 0.0
    %346 = vmatpush1.msra.mxu0 0.0
    %347 = vmatprep.subr.mxu0 0.0
    %348 = vmatpush1.msra.mxu0 0.0
    %349 = vmatprep.subr.mxu0 0.0
    %350 = vmatpush1.msra.mxu0 0.0
    %351 = vmatprep.subr.mxu0 0.0
    %352 = vmatpush1.msra.mxu0 0.0
    %353 = vmatprep.subr.mxu0 0.0
    %354 = vmatpush1.msra.mxu0 0.0
    %355 = vmatprep.subr.mxu0 0.0
    %356 = vmatpush1.msra.mxu0 0.0
    %357 = vmatprep.subr.mxu0 0.0
    %358 = vmatpush1.msra.mxu0 0.0
    %359 = vmatprep.subr.mxu0 0.0
    %360 = vmatpush1.msra.mxu0 0.0
    %361 = vmatprep.subr.mxu0 0.0
    %362 = vmatpush1.msra.mxu0 0.0
    %363 = vmatprep.subr.mxu0 0.0
    %364 = vmatpush1.msra.mxu0 0.0
    %365 = vmatprep.subr.mxu0 0.0
    %366 = vmatpush1.msra.mxu0 0.0
    %367 = vmatprep.subr.mxu0 0.0
    %368 = vmatpush1.msra.mxu0 0.0
    %369 = vmatprep.subr.mxu0 0.0
    %370 = vmatpush1.msra.mxu0 0.0
    %371 = vmatprep.subr.mxu0 0.0
    %372 = vmatpush1.msra.mxu0 0.0
    %373 = vmatprep.subr.mxu0 0.0
    %374 = vmatpush1.msra.mxu0 0.0
    %375 = vmatprep.subr.mxu0 0.0
    %376 = vmatpush1.msra.mxu0 0.0
    %377 = vmatprep.subr.mxu0 0.0
    %378 = vmatpush1.msra.mxu0 0.0
    %379 = vmatprep.subr.mxu0 0.0
    %380 = vmatpush1.msra.mxu0 0.0
    %381 = vmatprep.subr.mxu0 0.0
    %382 = vmatpush1.msra.mxu0 0.0
    %383 = vmatprep.subr.mxu0 0.0
    %384 = vmatpush1.msra.mxu0 0.0
    %385 = vmatprep.subr.mxu0 0.0
    %386 = vmatpush1.msra.mxu0 0.0
    %387 = vmatprep.subr.mxu0 0.0
    %388 = vmatpush1.msra.mxu0 0.0
    %389 = vmatprep.mubr.f32.mxu0 0.0
    %v390 = vand.u32 %v16, 4294901760
    %391 = vmatmul.mubr.f32.gmra.mrb[0].mxu0 %v390
    %v392 = vpop.f32.mrb[0].mxu0
    %v393 = vadd.f32 %v319, %v392
    %v394 = vpop.f32.mrb[0].mxu0
    %395 = vdwg.mxu0
    %396 = vmatprep.subr.mxu0 0.0
    %v397 = vand.u32 %v20, 4294901760
    %398 = vmatpush1.msra.mxu0 %v397
    %399 = vmatprep.subr.mxu0 0.0
    %400 = vmatpush1.msra.mxu0 0.0
    %401 = vmatprep.subr.mxu0 0.0
    %402 = vmatpush1.msra.mxu0 0.0
    %403 = vmatprep.subr.mxu0 0.0
    %404 = vmatpush1.msra.mxu0 0.0
    %405 = vmatprep.subr.mxu0 0.0
    %406 = vmatpush1.msra.mxu0 0.0
    %407 = vmatprep.subr.mxu0 0.0
    %408 = vmatpush1.msra.mxu0 0.0
    %409 = vmatprep.subr.mxu0 0.0
    %410 = vmatpush1.msra.mxu0 0.0
    %411 = vmatprep.subr.mxu0 0.0
    %412 = vmatpush1.msra.mxu0 0.0
    %413 = vmatprep.subr.mxu0 0.0
    %414 = vmatpush1.msra.mxu0 0.0
    %415 = vmatprep.subr.mxu0 0.0
    %416 = vmatpush1.msra.mxu0 0.0
    %417 = vmatprep.subr.mxu0 0.0
    %418 = vmatpush1.msra.mxu0 0.0
    %419 = vmatprep.subr.mxu0 0.0
    %420 = vmatpush1.msra.mxu0 0.0
    %421 = vmatprep.subr.mxu0 0.0
    %422 = vmatpush1.msra.mxu0 0.0
    %423 = vmatprep.subr.mxu0 0.0
    %424 = vmatpush1.msra.mxu0 0.0
    %425 = vmatprep.subr.mxu0 0.0
    %426 = vmatpush1.msra.mxu0 0.0
    %427 = vmatprep.subr.mxu0 0.0
    %428 = vmatpush1.msra.mxu0 0.0
    %429 = vmatprep.subr.mxu0 0.0
    %430 = vmatpush1.msra.mxu0 0.0
    %431 = vmatprep.subr.mxu0 0.0
    %432 = vmatpush1.msra.mxu0 0.0
    %433 = vmatprep.subr.mxu0 0.0
    %434 = vmatpush1.msra.mxu0 0.0
    %435 = vmatprep.subr.mxu0 0.0
    %436 = vmatpush1.msra.mxu0 0.0
    %437 = vmatprep.subr.mxu0 0.0
    %438 = vmatpush1.msra.mxu0 0.0
    %439 = vmatprep.subr.mxu0 0.0
    %440 = vmatpush1.msra.mxu0 0.0
    %441 = vmatprep.subr.mxu0 0.0
    %442 = vmatpush1.msra.mxu0 0.0
    %443 = vmatprep.subr.mxu0 0.0
    %444 = vmatpush1.msra.mxu0 0.0
    %445 = vmatprep.subr.mxu0 0.0
    %446 = vmatpush1.msra.mxu0 0.0
    %447 = vmatprep.subr.mxu0 0.0
    %448 = vmatpush1.msra.mxu0 0.0
    %449 = vmatprep.subr.mxu0 0.0
    %450 = vmatpush1.msra.mxu0 0.0
    %451 = vmatprep.subr.mxu0 0.0
    %452 = vmatpush1.msra.mxu0 0.0
    %453 = vmatprep.subr.mxu0 0.0
    %454 = vmatpush1.msra.mxu0 0.0
    %455 = vmatprep.subr.mxu0 0.0
    %456 = vmatpush1.msra.mxu0 0.0
    %457 = vmatprep.subr.mxu0 0.0
    %458 = vmatpush1.msra.mxu0 0.0
    %459 = vmatprep.subr.mxu0 0.0
    %460 = vmatpush1.msra.mxu0 0.0
    %461 = vmatprep.mubr.f32.mxu0 0.0
    %v462 = vand.u32 %v16, 4294901760
    %463 = vmatmul.mubr.f32.gmra.mrb[0].mxu0 %v462
    %v464 = vpop.f32.mrb[0].mxu0
    %v465 = vadd.f32 %v393, %v464
    %v466 = vpop.f32.mrb[0].mxu0
    %467 = vdwg.mxu0
    %468 = vst [vmem:[#allocation2] sm:$0xff] %v465
    // Predicated region
    $region10: #{tpu_custom_call.1} parent=1 // pred_check
      _
    $region11: #{tpu_custom_call.1} parent=1 // pred_check_branch
      %470 = sbr.rel (0) target = $region13
    $region12: #{tpu_custom_call.1} parent=1 // pred_region
      %s472 = ssub.s32 128, 128
      %473 = vsyncadd [#allocation3], %s472
      %s475 = sshll.u32 [#allocation2], 4
      %s476 = int_to_ptr.vmem [resolvable:$true] %s475
      %478 = dma.vmem_to_hbm [thread:$0]  %s476, 128, %s2, [#allocation3]
    $region13: #{tpu_custom_call.1} parent=1 // pred_fallthru
      _
    // Predicated region
    $region14: #{tpu_custom_call.1} parent=1 // pred_check
      _
    $region15: #{tpu_custom_call.1} parent=1 // pred_check_branch
      %480 = sbr.rel (0) target = $region17
    $region16: #{tpu_custom_call.1} parent=1 // pred_region
      %481 = dma.done [#allocation3], 128
    $region17: #{tpu_custom_call.1} parent=1 // pred_fallthru
      _
    %482 = vsyncpa [#allocation3], 1

</llo_original>
